<compile_context>
chip_gen: v5e
topology: v5e:2x2
jax: 0.10.0
libtpu: 0.0.40
codegen_flags: <defaults>
</compile_context>

<pallas_src>
import functools

import jax
import jax.numpy as jnp
from jax.experimental import pallas as pl
from jax.experimental.pallas import tpu as pltpu

_LANE = 128


def _round_up(x, m):
    return ((x + m - 1) // m) * m


def _cascade_kernel(num_layers, seg_in, seg_h, *refs):
    # refs = (x_ref, w0, b0, ..., w_{L-1}, b_{L-1}, w_ol, b_ol, out_ref, state_ref)
    x_ref = refs[0]
    out_ref = refs[-2]
    state_ref = refs[-1]
    params = refs[1:-2]

    compute_dtype = state_ref.dtype

    # Input goes into the first lane-aligned segment of the state scratch.
    state_ref[:, :seg_in] = x_ref[...].astype(compute_dtype)

    width = seg_in
    h = None
    for i in range(num_layers):
        w = params[2 * i][...]            # (width, seg_h), compute_dtype
        b = params[2 * i + 1][...]        # (1, seg_h), f32
        z = jnp.dot(state_ref[:, :width], w,
                    preferred_element_type=jnp.float32) + b
        h = jnp.tanh(z)                   # f32 elementwise
        if i < num_layers - 1:
            # Write tanh output into the next 128-aligned segment (no concat).
            state_ref[:, width:width + seg_h] = h.astype(compute_dtype)
            width += seg_h

    # Output projection (lane-dense padded slab; wrapper slices real columns).
    w_ol = params[2 * num_layers][...]
    b_ol = params[2 * num_layers + 1][...]
    out = jnp.dot(h.astype(compute_dtype), w_ol,
                  preferred_element_type=jnp.float32) + b_ol
    out_ref[...] = out.astype(out_ref.dtype)


def cascade_mlp_forward(x, layer_params, ol_params, *, num_layers,
                        compute_dtype=jnp.bfloat16, block_m=512):
    """x: (B, input_size) f32. layer_params[i] = (W_t, b) with W_t shape
    (input_size + hidden*i, hidden), b shape (hidden,) or (1, hidden).
    ol_params = (W_ol_t (hidden, output_size), b_ol)."""
    batch, input_size = x.shape
    hidden = layer_params[0][0].shape[1]
    output_size = ol_params[0].shape[1]

    seg_in = _round_up(input_size, _LANE)
    seg_h = _round_up(hidden, _LANE)
    out_pad = _round_up(output_size, _LANE)
    state_width = seg_in + seg_h * (num_layers - 1)

    # Batch tiling: TM rows per grid step (multiple of 8), batch padded to TM.
    tm = min(_round_up(block_m, 8), _round_up(batch, 8))
    b_pad = _round_up(batch, tm)

    # Zero-pad the input to (b_pad, seg_in).
    x_p = jnp.zeros((b_pad, seg_in), jnp.float32)
    x_p = x_p.at[:batch, :input_size].set(x)

    # Pad weights so each cascade segment of K sits at a 128-aligned offset,
    # and N is a full 128 lanes. Padded rows/cols are exactly zero, so they
    # contribute nothing to the dots and padded tanh columns are tanh(0)=0.
    flat_params = []
    for i, (w_t, b) in enumerate(layer_params):
        w_p = jnp.zeros((seg_in + seg_h * i, seg_h), jnp.float32)
        w_p = w_p.at[:input_size, :hidden].set(w_t[:input_size])
        for j in range(i):
            src = w_t[input_size + hidden * j: input_size + hidden * (j + 1)]
            dst = seg_in + seg_h * j
            w_p = w_p.at[dst:dst + hidden, :hidden].set(src)
        b_p = jnp.zeros((1, seg_h), jnp.float32)
        b_p = b_p.at[:, :hidden].set(jnp.reshape(b, (1, hidden)))
        flat_params.extend([w_p.astype(compute_dtype), b_p])

    w_ol_t, b_ol = ol_params
    w_ol_p = jnp.zeros((seg_h, out_pad), jnp.float32)
    w_ol_p = w_ol_p.at[:hidden, :output_size].set(w_ol_t)
    b_ol_p = jnp.zeros((1, out_pad), jnp.float32)
    b_ol_p = b_ol_p.at[:, :output_size].set(jnp.reshape(b_ol, (1, output_size)))
    flat_params.extend([w_ol_p.astype(compute_dtype), b_ol_p])

    # x is blocked over the batch grid; weights/biases use a constant
    # index_map so they are DMA'd once and stay resident across grid steps.
    in_specs = [pl.BlockSpec((tm, seg_in), lambda i: (i, 0))]
    for p in flat_params:
        in_specs.append(pl.BlockSpec(p.shape, lambda i: (0, 0)))

    kernel = functools.partial(_cascade_kernel, num_layers, seg_in, seg_h)

    out = pl.pallas_call(
        kernel,
        out_shape=jax.ShapeDtypeStruct((b_pad, out_pad), jnp.float32),
        grid=(b_pad // tm,),
        in_specs=in_specs,
        out_specs=pl.BlockSpec((tm, out_pad), lambda i: (i, 0)),
        scratch_shapes=[pltpu.VMEM((tm, state_width), compute_dtype)],
        compiler_params=pltpu.CompilerParams(
            dimension_semantics=("parallel",)),
    )(x_p, *flat_params)

    return out[:batch, :output_size]


def init_params(key, input_size, hidden, output_size, num_layers):
    """Mirrors the PyTorch module: xavier-uniform weights, nn.Linear-default
    uniform biases. Weights are stored pre-transposed (in, out) for x @ W."""
    layer_params = []
    for i in range(num_layers):
        fan_in = input_size + hidden * i
        fan_out = hidden
        key, kw, kb = jax.random.split(key, 3)
        bound_w = jnp.sqrt(6.0 / (fan_in + fan_out))
        w = jax.random.uniform(kw, (fan_out, fan_in), jnp.float32,
                               minval=-bound_w, maxval=bound_w)
        bound_b = 1.0 / jnp.sqrt(fan_in)
        b = jax.random.uniform(kb, (fan_out,), jnp.float32,
                               minval=-bound_b, maxval=bound_b)
        layer_params.append((w.T, b.reshape(1, -1)))

    key, kw, kb = jax.random.split(key, 3)
    bound_w = jnp.sqrt(6.0 / (hidden + output_size))
    w_ol = jax.random.uniform(kw, (output_size, hidden), jnp.float32,
                              minval=-bound_w, maxval=bound_w)
    bound_b = 1.0 / jnp.sqrt(hidden)
    b_ol = jax.random.uniform(kb, (output_size,), jnp.float32,
                              minval=-bound_b, maxval=bound_b)
    ol_params = (w_ol.T, b_ol.reshape(1, -1))
    return layer_params, ol_params


def reference_forward(x, layer_params, ol_params, num_layers):
    """Pure-JAX f32 reference replicating the PyTorch forward."""
    x_state = x
    for i in range(num_layers - 1):
        w_t, b = layer_params[i]
        x_out = jnp.tanh(x_state @ w_t + b)
        x_state = jnp.concatenate([x_state, x_out], axis=-1)
    w_t, b = layer_params[-1]
    x_out = jnp.tanh(x_state @ w_t + b)
    w_ol_t, b_ol = ol_params
    return x_out @ w_ol_t + b_ol


if __name__ == "__main__":
    batch = 8
    input_size = 16
    hidden = 32
    output_size = 8
    num_layers = 3

    key = jax.random.PRNGKey(0)
    key, kx = jax.random.split(key)
    x = jax.random.normal(kx, (batch, input_size), jnp.float32)

    layer_params, ol_params = init_params(
        key, input_size, hidden, output_size, num_layers)

    ref = reference_forward(x, layer_params, ol_params, num_layers)

    # Full-f32 matmul path: tight check against the reference.
    out_f32 = jax.block_until_ready(
        cascade_mlp_forward(x, layer_params, ol_params,
                            num_layers=num_layers,
                            compute_dtype=jnp.float32))
    assert out_f32.shape == (batch, output_size)
    assert jnp.allclose(out_f32, ref, atol=1e-4, rtol=1e-4), "f32 mismatch"

    # bf16 matmul operands (f32 accumulation): looser tolerance.
    out_bf16 = jax.block_until_ready(
        cascade_mlp_forward(x, layer_params, ol_params,
                            num_layers=num_layers,
                            compute_dtype=jnp.bfloat16))
    assert out_bf16.shape == (batch, output_size)
    assert jnp.allclose(out_bf16, ref, atol=5e-2, rtol=5e-2), "bf16 mismatch"

    print("KERNEL_OK")
</pallas_src>

<mosaic_0001>
module attributes {stable_mosaic.version = 11 : i64} {
  func.func @_cascade_kernel(%arg0: i32, %arg1: memref<8x128xf32, #tpu.memory_space<vmem>>, %arg2: memref<128x128xf32, #tpu.memory_space<vmem>>, %arg3: memref<1x128xf32, #tpu.memory_space<vmem>>, %arg4: memref<256x128xf32, #tpu.memory_space<vmem>>, %arg5: memref<1x128xf32, #tpu.memory_space<vmem>>, %arg6: memref<384x128xf32, #tpu.memory_space<vmem>>, %arg7: memref<1x128xf32, #tpu.memory_space<vmem>>, %arg8: memref<128x128xf32, #tpu.memory_space<vmem>>, %arg9: memref<1x128xf32, #tpu.memory_space<vmem>>, %arg10: memref<8x128xf32, #tpu.memory_space<vmem>>, %arg11: memref<8x384xf32, #tpu.memory_space<vmem>>) attributes {dimension_semantics = [#tpu.dimension_semantics<parallel>], iteration_bounds = array<i64: 1>, scalar_prefetch = 0 : i64, scratch_operands = 1 : i64, tpu.core_type = #tpu.core_type<tc>, window_params = [{transform_indices = @transform_0, window_bounds = array<i64: 8, 128>}, {pipeline_mode = #tpu.pipeline_mode<synchronous>, transform_indices = @transform_1, window_bounds = array<i64: 128, 128>}, {pipeline_mode = #tpu.pipeline_mode<synchronous>, transform_indices = @transform_2, window_bounds = array<i64: 1, 128>}, {pipeline_mode = #tpu.pipeline_mode<synchronous>, transform_indices = @transform_3, window_bounds = array<i64: 256, 128>}, {pipeline_mode = #tpu.pipeline_mode<synchronous>, transform_indices = @transform_4, window_bounds = array<i64: 1, 128>}, {pipeline_mode = #tpu.pipeline_mode<synchronous>, transform_indices = @transform_5, window_bounds = array<i64: 384, 128>}, {pipeline_mode = #tpu.pipeline_mode<synchronous>, transform_indices = @transform_6, window_bounds = array<i64: 1, 128>}, {pipeline_mode = #tpu.pipeline_mode<synchronous>, transform_indices = @transform_7, window_bounds = array<i64: 128, 128>}, {pipeline_mode = #tpu.pipeline_mode<synchronous>, transform_indices = @transform_8, window_bounds = array<i64: 1, 128>}, {transform_indices = @transform_9, window_bounds = array<i64: 8, 128>}]} {
    %c0 = arith.constant 0 : index
    %c0_0 = arith.constant 0 : index
    %0 = vector.load %arg1[%c0, %c0_0] : memref<8x128xf32, #tpu.memory_space<vmem>>, vector<8x128xf32>
    %c0_1 = arith.constant 0 : index
    %c0_2 = arith.constant 0 : index
    %1 = vector.load %arg11[%c0_1, %c0_2] : memref<8x384xf32, #tpu.memory_space<vmem>>, vector<8x128xf32>
    tpu.vector_store %arg11[%c0_1, %c0_2], %0 {strides = array<i32>} : memref<8x384xf32, #tpu.memory_space<vmem>>, vector<8x128xf32>,
    %c0_3 = arith.constant 0 : index
    %c0_4 = arith.constant 0 : index
    %2 = vector.load %arg2[%c0_3, %c0_4] : memref<128x128xf32, #tpu.memory_space<vmem>>, vector<128x128xf32>
    %c0_5 = arith.constant 0 : index
    %c0_6 = arith.constant 0 : index
    %3 = vector.load %arg3[%c0_5, %c0_6] : memref<1x128xf32, #tpu.memory_space<vmem>>, vector<1x128xf32>
    %c0_7 = arith.constant 0 : index
    %c0_8 = arith.constant 0 : index
    %4 = vector.load %arg11[%c0_7, %c0_8] : memref<8x384xf32, #tpu.memory_space<vmem>>, vector<8x128xf32>
    %cst = arith.constant dense<0.000000e+00> : vector<8x128xf32>
    %5 = tpu.matmul %4, %2, %cst {dimension_numbers = #tpu.dot_dimension_numbers<[1], [0], [0], [1], [0, 0, 1, 1], [], []>} : vector<8x128xf32>, vector<128x128xf32>, vector<8x128xf32> -> vector<8x128xf32>
    %6 = vector.broadcast %3 : vector<1x128xf32> to vector<8x128xf32>
    %7 = arith.addf %5, %6 : vector<8x128xf32>
    %8 = math.tanh %7 : vector<8x128xf32>
    %c0_9 = arith.constant 0 : index
    %c128 = arith.constant 128 : index
    %9 = vector.load %arg11[%c0_9, %c128] : memref<8x384xf32, #tpu.memory_space<vmem>>, vector<8x128xf32>
    tpu.vector_store %arg11[%c0_9, %c128], %8 {strides = array<i32>} : memref<8x384xf32, #tpu.memory_space<vmem>>, vector<8x128xf32>,
    %c0_10 = arith.constant 0 : index
    %c0_11 = arith.constant 0 : index
    %10 = vector.load %arg4[%c0_10, %c0_11] : memref<256x128xf32, #tpu.memory_space<vmem>>, vector<256x128xf32>
    %c0_12 = arith.constant 0 : index
    %c0_13 = arith.constant 0 : index
    %11 = vector.load %arg5[%c0_12, %c0_13] : memref<1x128xf32, #tpu.memory_space<vmem>>, vector<1x128xf32>
    %c0_14 = arith.constant 0 : index
    %c0_15 = arith.constant 0 : index
    %12 = vector.load %arg11[%c0_14, %c0_15] : memref<8x384xf32, #tpu.memory_space<vmem>>, vector<8x256xf32>
    %cst_16 = arith.constant dense<0.000000e+00> : vector<8x128xf32>
    %13 = tpu.matmul %12, %10, %cst_16 {dimension_numbers = #tpu.dot_dimension_numbers<[1], [0], [0], [1], [0, 0, 1, 1], [], []>} : vector<8x256xf32>, vector<256x128xf32>, vector<8x128xf32> -> vector<8x128xf32>
    %14 = vector.broadcast %11 : vector<1x128xf32> to vector<8x128xf32>
    %15 = arith.addf %13, %14 : vector<8x128xf32>
    %16 = math.tanh %15 : vector<8x128xf32>
    %c0_17 = arith.constant 0 : index
    %c256 = arith.constant 256 : index
    %17 = vector.load %arg11[%c0_17, %c256] : memref<8x384xf32, #tpu.memory_space<vmem>>, vector<8x128xf32>
    tpu.vector_store %arg11[%c0_17, %c256], %16 {strides = array<i32>} : memref<8x384xf32, #tpu.memory_space<vmem>>, vector<8x128xf32>,
    %c0_18 = arith.constant 0 : index
    %c0_19 = arith.constant 0 : index
    %18 = vector.load %arg6[%c0_18, %c0_19] : memref<384x128xf32, #tpu.memory_space<vmem>>, vector<384x128xf32>
    %c0_20 = arith.constant 0 : index
    %c0_21 = arith.constant 0 : index
    %19 = vector.load %arg7[%c0_20, %c0_21] : memref<1x128xf32, #tpu.memory_space<vmem>>, vector<1x128xf32>
    %c0_22 = arith.constant 0 : index
    %c0_23 = arith.constant 0 : index
    %20 = vector.load %arg11[%c0_22, %c0_23] : memref<8x384xf32, #tpu.memory_space<vmem>>, vector<8x384xf32>
    %cst_24 = arith.constant dense<0.000000e+00> : vector<8x128xf32>
    %21 = tpu.matmul %20, %18, %cst_24 {dimension_numbers = #tpu.dot_dimension_numbers<[1], [0], [0], [1], [0, 0, 1, 1], [], []>} : vector<8x384xf32>, vector<384x128xf32>, vector<8x128xf32> -> vector<8x128xf32>
    %22 = vector.broadcast %19 : vector<1x128xf32> to vector<8x128xf32>
    %23 = arith.addf %21, %22 : vector<8x128xf32>
    %24 = math.tanh %23 : vector<8x128xf32>
    %c0_25 = arith.constant 0 : index
    %c0_26 = arith.constant 0 : index
    %25 = vector.load %arg8[%c0_25, %c0_26] : memref<128x128xf32, #tpu.memory_space<vmem>>, vector<128x128xf32>
    %c0_27 = arith.constant 0 : index
    %c0_28 = arith.constant 0 : index
    %26 = vector.load %arg9[%c0_27, %c0_28] : memref<1x128xf32, #tpu.memory_space<vmem>>, vector<1x128xf32>
    %cst_29 = arith.constant dense<0.000000e+00> : vector<8x128xf32>
    %27 = tpu.matmul %24, %25, %cst_29 {dimension_numbers = #tpu.dot_dimension_numbers<[1], [0], [0], [1], [0, 0, 1, 1], [], []>} : vector<8x128xf32>, vector<128x128xf32>, vector<8x128xf32> -> vector<8x128xf32>
    %28 = vector.broadcast %26 : vector<1x128xf32> to vector<8x128xf32>
    %29 = arith.addf %27, %28 : vector<8x128xf32>
    %c0_30 = arith.constant 0 : index
    %c0_31 = arith.constant 0 : index
    %30 = vector.load %arg10[%c0_30, %c0_31] : memref<8x128xf32, #tpu.memory_space<vmem>>, vector<8x128xf32>
    tpu.vector_store %arg10[%c0_30, %c0_31], %29 {strides = array<i32>} : memref<8x128xf32, #tpu.memory_space<vmem>>, vector<8x128xf32>,
    return
  }
  func.func @transform_0(%arg0: i32) -> (i32, i32) {
    %c0_i32 = arith.constant 0 : i32
    %c0_i32_0 = arith.constant 0 : i32
    return %arg0, %c0_i32 : i32, i32
  }
  func.func @transform_1(%arg0: i32) -> (i32, i32) {
    %c0_i32 = arith.constant 0 : i32
    %c0_i32_0 = arith.constant 0 : i32
    %c0_i32_1 = arith.constant 0 : i32
    return %c0_i32, %c0_i32_0 : i32, i32
  }
  func.func @transform_2(%arg0: i32) -> (i32, i32) {
    %c0_i32 = arith.constant 0 : i32
    %c0_i32_0 = arith.constant 0 : i32
    %c0_i32_1 = arith.constant 0 : i32
    return %c0_i32, %c0_i32_0 : i32, i32
  }
  func.func @transform_3(%arg0: i32) -> (i32, i32) {
    %c0_i32 = arith.constant 0 : i32
    %c0_i32_0 = arith.constant 0 : i32
    %c0_i32_1 = arith.constant 0 : i32
    return %c0_i32, %c0_i32_0 : i32, i32
  }
  func.func @transform_4(%arg0: i32) -> (i32, i32) {
    %c0_i32 = arith.constant 0 : i32
    %c0_i32_0 = arith.constant 0 : i32
    %c0_i32_1 = arith.constant 0 : i32
    return %c0_i32, %c0_i32_0 : i32, i32
  }
  func.func @transform_5(%arg0: i32) -> (i32, i32) {
    %c0_i32 = arith.constant 0 : i32
    %c0_i32_0 = arith.constant 0 : i32
    %c0_i32_1 = arith.constant 0 : i32
    return %c0_i32, %c0_i32_0 : i32, i32
  }
  func.func @transform_6(%arg0: i32) -> (i32, i32) {
    %c0_i32 = arith.constant 0 : i32
    %c0_i32_0 = arith.constant 0 : i32
    %c0_i32_1 = arith.constant 0 : i32
    return %c0_i32, %c0_i32_0 : i32, i32
  }
  func.func @transform_7(%arg0: i32) -> (i32, i32) {
    %c0_i32 = arith.constant 0 : i32
    %c0_i32_0 = arith.constant 0 : i32
    %c0_i32_1 = arith.constant 0 : i32
    return %c0_i32, %c0_i32_0 : i32, i32
  }
  func.func @transform_8(%arg0: i32) -> (i32, i32) {
    %c0_i32 = arith.constant 0 : i32
    %c0_i32_0 = arith.constant 0 : i32
    %c0_i32_1 = arith.constant 0 : i32
    return %c0_i32, %c0_i32_0 : i32, i32
  }
  func.func @transform_9(%arg0: i32) -> (i32, i32) {
    %c0_i32 = arith.constant 0 : i32
    %c0_i32_0 = arith.constant 0 : i32
    return %arg0, %c0_i32 : i32, i32
  }
}

</mosaic_0001>

<llo_original>
// kernel: tpu_custom_call.1
$region0: #{tpu_custom_call.1}
  #allocation0 [shape = 'u32[]', space=smem, size = 0x4, offset = 0x4, fixed_abs, tag = 'smem constant byte address 0x4 - core index']
  #allocation1 [shape = 'u32[72,128]{1,0:T(1,128)}', space=vmem, size = 0x9000, scoped, tag = 'internal scratch']
  #allocation2 [shape = 'f32[8,384]{1,0:T(8,128)}', space=vmem, size = 0x3000, scoped, tag = 'scratch operand']
  %s0 = inlined_call_operand.hbm [shape: f32[8,128], index: 0, kind: input, shape index: {}]
  %s1 = inlined_call_operand.hbm [shape: f32[128,128], index: 1, kind: input, shape index: {}]
  %s2 = inlined_call_operand.vmem [shape: f32[1,128], index: 2, kind: input, shape index: {}]
  %s3 = inlined_call_operand.hbm [shape: f32[256,128], index: 3, kind: input, shape index: {}]
  %s4 = inlined_call_operand.vmem [shape: f32[1,128], index: 4, kind: input, shape index: {}]
  %s5 = inlined_call_operand.hbm [shape: f32[384,128], index: 5, kind: input, shape index: {}]
  %s6 = inlined_call_operand.vmem [shape: f32[1,128], index: 6, kind: input, shape index: {}]
  %s7 = inlined_call_operand.hbm [shape: f32[128,128], index: 7, kind: input, shape index: {}]
  %s8 = inlined_call_operand.vmem [shape: f32[1,128], index: 8, kind: input, shape index: {}]
  %s9 = inlined_call_operand.hbm [shape: f32[8,128], index: 9, kind: output, shape index: {}]
  %s10 = sld [smem:[#allocation0]]
  $region66: #{tpu_custom_call.1} parent=0
    _
  %s12 = ssub.s32 1, %s10
  %s13 = scalar_select 0, %s12, %s10
  $region1: #{tpu_custom_call.1} parent=0
    #allocation3 [shape = 'u8[4096]{0}', space=vmem, size = 0x1000, scoped, tag = 'input window, operand 0, single buffered']
    #allocation4 [shape = 's32[1]{0}', space=sflag, size = 0x4, scoped, tag = 'scoped memory for tpu_custom_call.1']
    #allocation5 [shape = 's32[1]{0}', space=sflag, size = 0x4, scoped, tag = 'scoped memory for tpu_custom_call.1']
    #allocation6 [shape = 'u8[65536]{0}', space=vmem, size = 0x10000, scoped, tag = 'input window, operand 1, single buffered']
    #allocation7 [shape = 's32[1]{0}', space=sflag, size = 0x4, scoped, tag = 'scoped memory for tpu_custom_call.1']
    #allocation8 [shape = 'u8[131072]{0}', space=vmem, size = 0x20000, scoped, tag = 'input window, operand 3, single buffered']
    #allocation9 [shape = 'u8[196608]{0}', space=vmem, size = 0x30000, scoped, tag = 'input window, operand 5, single buffered']
    #allocation10 [shape = 's32[1]{0}', space=sflag, size = 0x4, scoped, tag = 'scoped memory for tpu_custom_call.1']
    #allocation11 [shape = 'u8[65536]{0}', space=vmem, size = 0x10000, scoped, tag = 'input window, operand 7, single buffered']
    #allocation12 [shape = 'u8[4096]{0}', space=vmem, size = 0x1000, scoped, tag = 'output window, operand 0, single buffered']
    %14 = vsyncpa [#allocation4], 0
    %15 = vsyncpa [#allocation7], 0
    %16 = vsyncpa [#allocation10], 0
    %17 = vsyncpa [#allocation5], 0
    // Predicated region
    $region2: #{tpu_custom_call.1} parent=1 // pred_check
      _
    $region3: #{tpu_custom_call.1} parent=1 // pred_check_branch
      %19 = sbr.rel (0) target = $region5
    $region4: #{tpu_custom_call.1} parent=1 // pred_region
      %21 = vsyncadd [#allocation4], 0
      %s23 = sshll.u32 %s0, 4
      %s24 = int_to_ptr.hbm [resolvable:$true] %s23
      %s25 = sshll.u32 [#allocation3], 4
      %s26 = int_to_ptr.vmem [resolvable:$true] %s25
      %28 = dma.hbm_to_vmem [thread:$0]  %s24, 128, %s26, [#allocation4]
    $region5: #{tpu_custom_call.1} parent=1 // pred_fallthru
      _
    // Predicated region
    $region6: #{tpu_custom_call.1} parent=1 // pred_check
      _
    $region7: #{tpu_custom_call.1} parent=1 // pred_check_branch
      %30 = sbr.rel (0) target = $region9
    $region8: #{tpu_custom_call.1} parent=1 // pred_region
      %32 = vsyncadd [#allocation7], 0
      %s33 = sshll.u32 %s1, 4
      %s34 = int_to_ptr.hbm [resolvable:$true] %s33
      %s35 = sshll.u32 [#allocation6], 4
      %s36 = int_to_ptr.vmem [resolvable:$true] %s35
      %41 = dma.hbm_to_vmem [thread:$0]  %s34, 2048, %s36, [#allocation7], 128, 128, 8
    $region9: #{tpu_custom_call.1} parent=1 // pred_fallthru
      _
    // Predicated region
    $region10: #{tpu_custom_call.1} parent=1 // pred_check
      _
    $region11: #{tpu_custom_call.1} parent=1 // pred_check_branch
      %43 = sbr.rel (0) target = $region13
    $region12: #{tpu_custom_call.1} parent=1 // pred_region
      _
    $region13: #{tpu_custom_call.1} parent=1 // pred_fallthru
      _
    // Predicated region
    $region14: #{tpu_custom_call.1} parent=1 // pred_check
      _
    $region15: #{tpu_custom_call.1} parent=1 // pred_check_branch
      %45 = sbr.rel (0) target = $region17
    $region16: #{tpu_custom_call.1} parent=1 // pred_region
      %47 = vsyncadd [#allocation7], 0
      %s48 = sshll.u32 %s3, 4
      %s49 = int_to_ptr.hbm [resolvable:$true] %s48
      %s50 = sshll.u32 [#allocation8], 4
      %s51 = int_to_ptr.vmem [resolvable:$true] %s50
      %56 = dma.hbm_to_vmem [thread:$0]  %s49, 4096, %s51, [#allocation7], 128, 128, 8
    $region17: #{tpu_custom_call.1} parent=1 // pred_fallthru
      _
    // Predicated region
    $region18: #{tpu_custom_call.1} parent=1 // pred_check
      _
    $region19: #{tpu_custom_call.1} parent=1 // pred_check_branch
      %58 = sbr.rel (0) target = $region21
    $region20: #{tpu_custom_call.1} parent=1 // pred_region
      _
    $region21: #{tpu_custom_call.1} parent=1 // pred_fallthru
      _
    // Predicated region
    $region22: #{tpu_custom_call.1} parent=1 // pred_check
      _
    $region23: #{tpu_custom_call.1} parent=1 // pred_check_branch
      %60 = sbr.rel (0) target = $region25
    $region24: #{tpu_custom_call.1} parent=1 // pred_region
      %62 = vsyncadd [#allocation10], 0
      %s63 = sshll.u32 %s5, 4
      %s64 = int_to_ptr.hbm [resolvable:$true] %s63
      %s65 = sshll.u32 [#allocation9], 4
      %s66 = int_to_ptr.vmem [resolvable:$true] %s65
      %71 = dma.hbm_to_vmem [thread:$0]  %s64, 6144, %s66, [#allocation10], 128, 128, 8
    $region25: #{tpu_custom_call.1} parent=1 // pred_fallthru
      _
    // Predicated region
    $region26: #{tpu_custom_call.1} parent=1 // pred_check
      _
    $region27: #{tpu_custom_call.1} parent=1 // pred_check_branch
      %73 = sbr.rel (0) target = $region29
    $region28: #{tpu_custom_call.1} parent=1 // pred_region
      _
    $region29: #{tpu_custom_call.1} parent=1 // pred_fallthru
      _
    // Predicated region
    $region30: #{tpu_custom_call.1} parent=1 // pred_check
      _
    $region31: #{tpu_custom_call.1} parent=1 // pred_check_branch
      %75 = sbr.rel (0) target = $region33
    $region32: #{tpu_custom_call.1} parent=1 // pred_region
      %77 = vsyncadd [#allocation10], 0
      %s78 = sshll.u32 %s7, 4
      %s79 = int_to_ptr.hbm [resolvable:$true] %s78
      %s80 = sshll.u32 [#allocation11], 4
      %s81 = int_to_ptr.vmem [resolvable:$true] %s80
      %86 = dma.hbm_to_vmem [thread:$0]  %s79, 2048, %s81, [#allocation10], 128, 128, 8
    $region33: #{tpu_custom_call.1} parent=1 // pred_fallthru
      _
    // Predicated region
    $region34: #{tpu_custom_call.1} parent=1 // pred_check
      _
    $region35: #{tpu_custom_call.1} parent=1 // pred_check_branch
      %88 = sbr.rel (0) target = $region37
    $region36: #{tpu_custom_call.1} parent=1 // pred_region
      _
    $region37: #{tpu_custom_call.1} parent=1 // pred_fallthru
      _
    // Predicated region
    $region38: #{tpu_custom_call.1} parent=1 // pred_check
      _
    $region39: #{tpu_custom_call.1} parent=1 // pred_check_branch
      %90 = sbr.rel (0) target = $region41
    $region40: #{tpu_custom_call.1} parent=1 // pred_region
      %92 = dma.done [#allocation4], 128
    $region41: #{tpu_custom_call.1} parent=1 // pred_fallthru
      _
    // Predicated region
    $region42: #{tpu_custom_call.1} parent=1 // pred_check
      _
    $region43: #{tpu_custom_call.1} parent=1 // pred_check_branch
      %94 = sbr.rel (0) target = $region45
    $region44: #{tpu_custom_call.1} parent=1 // pred_region
      %96 = dma.done [#allocation7], 2048
    $region45: #{tpu_custom_call.1} parent=1 // pred_fallthru
      _
    // Predicated region
    $region46: #{tpu_custom_call.1} parent=1 // pred_check
      _
    $region47: #{tpu_custom_call.1} parent=1 // pred_check_branch
      %98 = sbr.rel (0) target = $region49
    $region48: #{tpu_custom_call.1} parent=1 // pred_region
      %100 = dma.done [#allocation7], 4096
    $region49: #{tpu_custom_call.1} parent=1 // pred_fallthru
      _
    // Predicated region
    $region50: #{tpu_custom_call.1} parent=1 // pred_check
      _
    $region51: #{tpu_custom_call.1} parent=1 // pred_check_branch
      %102 = sbr.rel (0) target = $region53
    $region52: #{tpu_custom_call.1} parent=1 // pred_region
      %104 = dma.done [#allocation10], 6144
    $region53: #{tpu_custom_call.1} parent=1 // pred_fallthru
      _
    // Predicated region
    $region54: #{tpu_custom_call.1} parent=1 // pred_check
      _
    $region55: #{tpu_custom_call.1} parent=1 // pred_check_branch
      %106 = sbr.rel (0) target = $region57
    $region56: #{tpu_custom_call.1} parent=1 // pred_region
      %108 = dma.done [#allocation10], 2048
    $region57: #{tpu_custom_call.1} parent=1 // pred_fallthru
      _
    %v109 = vld [vmem:[#allocation3] sm:$0xff]
    %110 = vst [vmem:[#allocation2] sm:$0xff] %v109
    %v111 = vld [vmem:[#allocation6] sm:$0xff]
    %v112 = vld [vmem:[#allocation6 + $0x8] sm:$0xff]
    %v113 = vld [vmem:[#allocation6 + $0x10] sm:$0xff]
    %v114 = vld [vmem:[#allocation6 + $0x18] sm:$0xff]
    %v115 = vld [vmem:[#allocation6 + $0x20] sm:$0xff]
    %v116 = vld [vmem:[#allocation6 + $0x28] sm:$0xff]
    %v117 = vld [vmem:[#allocation6 + $0x30] sm:$0xff]
    %v118 = vld [vmem:[#allocation6 + $0x38] sm:$0xff]
    %v119 = vld [vmem:[#allocation6 + $0x40] sm:$0xff]
    %v120 = vld [vmem:[#allocation6 + $0x48] sm:$0xff]
    %v121 = vld [vmem:[#allocation6 + $0x50] sm:$0xff]
    %v122 = vld [vmem:[#allocation6 + $0x58] sm:$0xff]
    %v123 = vld [vmem:[#allocation6 + $0x60] sm:$0xff]
    %v124 = vld [vmem:[#allocation6 + $0x68] sm:$0xff]
    %v125 = vld [vmem:[#allocation6 + $0x70] sm:$0xff]
    %v126 = vld [vmem:[#allocation6 + $0x78] sm:$0xff]
    %v127 = vld [vmem:[%s2] sm:$0x1]
    %v128 = vld [vmem:[#allocation2] sm:$0xff]
    %v130 = vperm.slane %v127, 0
    %132 = vmatpush.msra.mxu0 %v126
    %133 = vmatpush.msra.mxu0 %v125
    %134 = vmatpush.msra.mxu0 %v124
    %135 = vmatpush.msra.mxu0 %v123
    %136 = vmatpush.msra.mxu0 %v122
    %137 = vmatpush.msra.mxu0 %v121
    %138 = vmatpush.msra.mxu0 %v120
    %139 = vmatpush.msra.mxu0 %v119
    %140 = vmatpush.msra.mxu0 %v118
    %141 = vmatpush.msra.mxu0 %v117
    %142 = vmatpush.msra.mxu0 %v116
    %143 = vmatpush.msra.mxu0 %v115
    %144 = vmatpush.msra.mxu0 %v114
    %145 = vmatpush.msra.mxu0 %v113
    %146 = vmatpush.msra.mxu0 %v112
    %147 = vmatpush.msra.mxu0 %v111
    %148 = vmatmul.f32.gmra.mxu0 %v128
    %v149 = vpop.f32.mrf.mxu0
    %v150 = vadd.f32 %v130, %v149
    %151 = vdwg.mxu0
    %v152 = vtanh.pop %v150
    %153 = vst [vmem:[#allocation2 + $0x8] sm:$0xff] %v152
    %v154 = vld [vmem:[#allocation8] sm:$0xff]
    %v155 = vld [vmem:[#allocation8 + $0x8] sm:$0xff]
    %v156 = vld [vmem:[#allocation8 + $0x10] sm:$0xff]
    %v157 = vld [vmem:[#allocation8 + $0x18] sm:$0xff]
    %v158 = vld [vmem:[#allocation8 + $0x20] sm:$0xff]
    %v159 = vld [vmem:[#allocation8 + $0x28] sm:$0xff]
    %v160 = vld [vmem:[#allocation8 + $0x30] sm:$0xff]
    %v161 = vld [vmem:[#allocation8 + $0x38] sm:$0xff]
    %v162 = vld [vmem:[#allocation8 + $0x40] sm:$0xff]
    %v163 = vld [vmem:[#allocation8 + $0x48] sm:$0xff]
    %v164 = vld [vmem:[#allocation8 + $0x50] sm:$0xff]
    %v165 = vld [vmem:[#allocation8 + $0x58] sm:$0xff]
    %v166 = vld [vmem:[#allocation8 + $0x60] sm:$0xff]
    %v167 = vld [vmem:[#allocation8 + $0x68] sm:$0xff]
    %v168 = vld [vmem:[#allocation8 + $0x70] sm:$0xff]
    %v169 = vld [vmem:[#allocation8 + $0x78] sm:$0xff]
    %v170 = vld [vmem:[#allocation8 + $0x80] sm:$0xff]
    %v171 = vld [vmem:[#allocation8 + $0x88] sm:$0xff]
    %v172 = vld [vmem:[#allocation8 + $0x90] sm:$0xff]
    %v173 = vld [vmem:[#allocation8 + $0x98] sm:$0xff]
    %v174 = vld [vmem:[#allocation8 + $0xa0] sm:$0xff]
    %v175 = vld [vmem:[#allocation8 + $0xa8] sm:$0xff]
    %v176 = vld [vmem:[#allocation8 + $0xb0] sm:$0xff]
    %v177 = vld [vmem:[#allocation8 + $0xb8] sm:$0xff]
    %v178 = vld [vmem:[#allocation8 + $0xc0] sm:$0xff]
    %v179 = vld [vmem:[#allocation8 + $0xc8] sm:$0xff]
    %v180 = vld [vmem:[#allocation8 + $0xd0] sm:$0xff]
    %v181 = vld [vmem:[#allocation8 + $0xd8] sm:$0xff]
    %v182 = vld [vmem:[#allocation8 + $0xe0] sm:$0xff]
    %v183 = vld [vmem:[#allocation8 + $0xe8] sm:$0xff]
    %v184 = vld [vmem:[#allocation8 + $0xf0] sm:$0xff]
    %v185 = vld [vmem:[#allocation8 + $0xf8] sm:$0xff]
    %v186 = vld [vmem:[%s4] sm:$0x1]
    %v187 = vld [vmem:[#allocation2] sm:$0xff]
    %v188 = vld [vmem:[#allocation2 + $0x8] sm:$0xff]
    %v190 = vperm.slane %v186, 0
    %192 = vmatpush.msra.mxu0 %v169
    %193 = vmatpush.msra.mxu0 %v168
    %194 = vmatpush.msra.mxu0 %v167
    %195 = vmatpush.msra.mxu0 %v166
    %196 = vmatpush.msra.mxu0 %v165
    %197 = vmatpush.msra.mxu0 %v164
    %198 = vmatpush.msra.mxu0 %v163
    %199 = vmatpush.msra.mxu0 %v162
    %200 = vmatpush.msra.mxu0 %v161
    %201 = vmatpush.msra.mxu0 %v160
    %202 = vmatpush.msra.mxu0 %v159
    %203 = vmatpush.msra.mxu0 %v158
    %204 = vmatpush.msra.mxu0 %v157
    %205 = vmatpush.msra.mxu0 %v156
    %206 = vmatpush.msra.mxu0 %v155
    %207 = vmatpush.msra.mxu0 %v154
    %208 = vmatmul.f32.gmra.mxu0 %v187
    %v209 = vpop.f32.mrf.mxu0
    %v210 = vadd.f32 %v190, %v209
    %211 = vdwg.mxu0
    %212 = vmatpush.msra.mxu0 %v185
    %213 = vmatpush.msra.mxu0 %v184
    %214 = vmatpush.msra.mxu0 %v183
    %215 = vmatpush.msra.mxu0 %v182
    %216 = vmatpush.msra.mxu0 %v181
    %217 = vmatpush.msra.mxu0 %v180
    %218 = vmatpush.msra.mxu0 %v179
    %219 = vmatpush.msra.mxu0 %v178
    %220 = vmatpush.msra.mxu0 %v177
    %221 = vmatpush.msra.mxu0 %v176
    %222 = vmatpush.msra.mxu0 %v175
    %223 = vmatpush.msra.mxu0 %v174
    %224 = vmatpush.msra.mxu0 %v173
    %225 = vmatpush.msra.mxu0 %v172
    %226 = vmatpush.msra.mxu0 %v171
    %227 = vmatpush.msra.mxu0 %v170
    %228 = vmatmul.f32.gmra.mxu0 %v188
    %v229 = vpop.f32.mrf.mxu0
    %v230 = vadd.f32 %v210, %v229
    %231 = vdwg.mxu0
    %v232 = vtanh.pop %v230
    %233 = vst [vmem:[#allocation2 + $0x10] sm:$0xff] %v232
    %v234 = vld [vmem:[#allocation9] sm:$0xff]
    %v235 = vld [vmem:[#allocation9 + $0x8] sm:$0xff]
    %v236 = vld [vmem:[#allocation9 + $0x10] sm:$0xff]
    %v237 = vld [vmem:[#allocation9 + $0x18] sm:$0xff]
    %v238 = vld [vmem:[#allocation9 + $0x20] sm:$0xff]
    %v239 = vld [vmem:[#allocation9 + $0x28] sm:$0xff]
    %v240 = vld [vmem:[#allocation9 + $0x30] sm:$0xff]
    %v241 = vld [vmem:[#allocation9 + $0x38] sm:$0xff]
    %v242 = vld [vmem:[#allocation9 + $0x40] sm:$0xff]
    %v243 = vld [vmem:[#allocation9 + $0x48] sm:$0xff]
    %v244 = vld [vmem:[#allocation9 + $0x50] sm:$0xff]
    %v245 = vld [vmem:[#allocation9 + $0x58] sm:$0xff]
    %v246 = vld [vmem:[#allocation9 + $0x60] sm:$0xff]
    %v247 = vld [vmem:[#allocation9 + $0x68] sm:$0xff]
    %v248 = vld [vmem:[#allocation9 + $0x70] sm:$0xff]
    %v249 = vld [vmem:[#allocation9 + $0x78] sm:$0xff]
    %v250 = vld [vmem:[#allocation9 + $0x80] sm:$0xff]
    %v251 = vld [vmem:[#allocation9 + $0x88] sm:$0xff]
    %v252 = vld [vmem:[#allocation9 + $0x90] sm:$0xff]
    %v253 = vld [vmem:[#allocation9 + $0x98] sm:$0xff]
    %v254 = vld [vmem:[#allocation9 + $0xa0] sm:$0xff]
    %v255 = vld [vmem:[#allocation9 + $0xa8] sm:$0xff]
    %v256 = vld [vmem:[#allocation9 + $0xb0] sm:$0xff]
    %v257 = vld [vmem:[#allocation9 + $0xb8] sm:$0xff]
    %v258 = vld [vmem:[#allocation9 + $0xc0] sm:$0xff]
    %v259 = vld [vmem:[#allocation9 + $0xc8] sm:$0xff]
    %v260 = vld [vmem:[#allocation9 + $0xd0] sm:$0xff]
    %v261 = vld [vmem:[#allocation9 + $0xd8] sm:$0xff]
    %v262 = vld [vmem:[#allocation9 + $0xe0] sm:$0xff]
    %v263 = vld [vmem:[#allocation9 + $0xe8] sm:$0xff]
    %v264 = vld [vmem:[#allocation9 + $0xf0] sm:$0xff]
    %v265 = vld [vmem:[#allocation9 + $0xf8] sm:$0xff]
    %v266 = vld [vmem:[#allocation9 + $0x100] sm:$0xff]
    %v267 = vld [vmem:[#allocation9 + $0x108] sm:$0xff]
    %v268 = vld [vmem:[#allocation9 + $0x110] sm:$0xff]
    %v269 = vld [vmem:[#allocation9 + $0x118] sm:$0xff]
    %v270 = vld [vmem:[#allocation9 + $0x120] sm:$0xff]
    %v271 = vld [vmem:[#allocation9 + $0x128] sm:$0xff]
    %v272 = vld [vmem:[#allocation9 + $0x130] sm:$0xff]
    %v273 = vld [vmem:[#allocation9 + $0x138] sm:$0xff]
    %v274 = vld [vmem:[#allocation9 + $0x140] sm:$0xff]
    %v275 = vld [vmem:[#allocation9 + $0x148] sm:$0xff]
    %v276 = vld [vmem:[#allocation9 + $0x150] sm:$0xff]
    %v277 = vld [vmem:[#allocation9 + $0x158] sm:$0xff]
    %v278 = vld [vmem:[#allocation9 + $0x160] sm:$0xff]
    %v279 = vld [vmem:[#allocation9 + $0x168] sm:$0xff]
    %v280 = vld [vmem:[#allocation9 + $0x170] sm:$0xff]
    %v281 = vld [vmem:[#allocation9 + $0x178] sm:$0xff]
    %v282 = vld [vmem:[%s6] sm:$0x1]
    %v283 = vld [vmem:[#allocation2] sm:$0xff]
    %v284 = vld [vmem:[#allocation2 + $0x8] sm:$0xff]
    %v285 = vld [vmem:[#allocation2 + $0x10] sm:$0xff]
    %v287 = vperm.slane %v282, 0
    %289 = vmatpush.msra.mxu0 %v249
    %290 = vmatpush.msra.mxu0 %v248
    %291 = vmatpush.msra.mxu0 %v247
    %292 = vmatpush.msra.mxu0 %v246
    %293 = vmatpush.msra.mxu0 %v245
    %294 = vmatpush.msra.mxu0 %v244
    %295 = vmatpush.msra.mxu0 %v243
    %296 = vmatpush.msra.mxu0 %v242
    %297 = vmatpush.msra.mxu0 %v241
    %298 = vmatpush.msra.mxu0 %v240
    %299 = vmatpush.msra.mxu0 %v239
    %300 = vmatpush.msra.mxu0 %v238
    %301 = vmatpush.msra.mxu0 %v237
    %302 = vmatpush.msra.mxu0 %v236
    %303 = vmatpush.msra.mxu0 %v235
    %304 = vmatpush.msra.mxu0 %v234
    %305 = vmatmul.f32.gmra.mxu0 %v283
    %v306 = vpop.f32.mrf.mxu0
    %v307 = vadd.f32 %v287, %v306
    %308 = vdwg.mxu0
    %309 = vmatpush.msra.mxu0 %v265
    %310 = vmatpush.msra.mxu0 %v264
    %311 = vmatpush.msra.mxu0 %v263
    %312 = vmatpush.msra.mxu0 %v262
    %313 = vmatpush.msra.mxu0 %v261
    %314 = vmatpush.msra.mxu0 %v260
    %315 = vmatpush.msra.mxu0 %v259
    %316 = vmatpush.msra.mxu0 %v258
    %317 = vmatpush.msra.mxu0 %v257
    %318 = vmatpush.msra.mxu0 %v256
    %319 = vmatpush.msra.mxu0 %v255
    %320 = vmatpush.msra.mxu0 %v254
    %321 = vmatpush.msra.mxu0 %v253
    %322 = vmatpush.msra.mxu0 %v252
    %323 = vmatpush.msra.mxu0 %v251
    %324 = vmatpush.msra.mxu0 %v250
    %325 = vmatmul.f32.gmra.mxu0 %v284
    %v326 = vpop.f32.mrf.mxu0
    %v327 = vadd.f32 %v307, %v326
    %328 = vdwg.mxu0
    %329 = vmatpush.msra.mxu0 %v281
    %330 = vmatpush.msra.mxu0 %v280
    %331 = vmatpush.msra.mxu0 %v279
    %332 = vmatpush.msra.mxu0 %v278
    %333 = vmatpush.msra.mxu0 %v277
    %334 = vmatpush.msra.mxu0 %v276
    %335 = vmatpush.msra.mxu0 %v275
    %336 = vmatpush.msra.mxu0 %v274
    %337 = vmatpush.msra.mxu0 %v273
    %338 = vmatpush.msra.mxu0 %v272
    %339 = vmatpush.msra.mxu0 %v271
    %340 = vmatpush.msra.mxu0 %v270
    %341 = vmatpush.msra.mxu0 %v269
    %342 = vmatpush.msra.mxu0 %v268
    %343 = vmatpush.msra.mxu0 %v267
    %344 = vmatpush.msra.mxu0 %v266
    %345 = vmatmul.f32.gmra.mxu0 %v285
    %v346 = vpop.f32.mrf.mxu0
    %v347 = vadd.f32 %v327, %v346
    %348 = vdwg.mxu0
    %v349 = vtanh.pop %v347
    %v350 = vld [vmem:[#allocation11] sm:$0xff]
    %v351 = vld [vmem:[#allocation11 + $0x8] sm:$0xff]
    %v352 = vld [vmem:[#allocation11 + $0x10] sm:$0xff]
    %v353 = vld [vmem:[#allocation11 + $0x18] sm:$0xff]
    %v354 = vld [vmem:[#allocation11 + $0x20] sm:$0xff]
    %v355 = vld [vmem:[#allocation11 + $0x28] sm:$0xff]
    %v356 = vld [vmem:[#allocation11 + $0x30] sm:$0xff]
    %v357 = vld [vmem:[#allocation11 + $0x38] sm:$0xff]
    %v358 = vld [vmem:[#allocation11 + $0x40] sm:$0xff]
    %v359 = vld [vmem:[#allocation11 + $0x48] sm:$0xff]
    %v360 = vld [vmem:[#allocation11 + $0x50] sm:$0xff]
    %v361 = vld [vmem:[#allocation11 + $0x58] sm:$0xff]
    %v362 = vld [vmem:[#allocation11 + $0x60] sm:$0xff]
    %v363 = vld [vmem:[#allocation11 + $0x68] sm:$0xff]
    %v364 = vld [vmem:[#allocation11 + $0x70] sm:$0xff]
    %v365 = vld [vmem:[#allocation11 + $0x78] sm:$0xff]
    %v366 = vld [vmem:[%s8] sm:$0x1]
    %v368 = vperm.slane %v366, 0
    %370 = vmatpush.msra.mxu0 %v365
    %371 = vmatpush.msra.mxu0 %v364
    %372 = vmatpush.msra.mxu0 %v363
    %373 = vmatpush.msra.mxu0 %v362
    %374 = vmatpush.msra.mxu0 %v361
    %375 = vmatpush.msra.mxu0 %v360
    %376 = vmatpush.msra.mxu0 %v359
    %377 = vmatpush.msra.mxu0 %v358
    %378 = vmatpush.msra.mxu0 %v357
    %379 = vmatpush.msra.mxu0 %v356
    %380 = vmatpush.msra.mxu0 %v355
    %381 = vmatpush.msra.mxu0 %v354
    %382 = vmatpush.msra.mxu0 %v353
    %383 = vmatpush.msra.mxu0 %v352
    %384 = vmatpush.msra.mxu0 %v351
    %385 = vmatpush.msra.mxu0 %v350
    %386 = vmatmul.f32.gmra.mxu0 %v349
    %v387 = vpop.f32.mrf.mxu0
    %v388 = vadd.f32 %v368, %v387
    %389 = vdwg.mxu0
    %390 = vst [vmem:[#allocation12] sm:$0xff] %v388
    // Predicated region
    $region58: #{tpu_custom_call.1} parent=1 // pred_check
      _
    $region59: #{tpu_custom_call.1} parent=1 // pred_check_branch
      %392 = sbr.rel (0) target = $region61
    $region60: #{tpu_custom_call.1} parent=1 // pred_region
      %394 = vsyncadd [#allocation5], 0
      %s396 = sshll.u32 [#allocation12], 4
      %s397 = int_to_ptr.vmem [resolvable:$true] %s396
      %s398 = sshll.u32 %s9, 4
      %s399 = int_to_ptr.hbm [resolvable:$true] %s398
      %401 = dma.vmem_to_hbm [thread:$0]  %s397, 128, %s399, [#allocation5]
    $region61: #{tpu_custom_call.1} parent=1 // pred_fallthru
      _
    // Predicated region
    $region62: #{tpu_custom_call.1} parent=1 // pred_check
      _
    $region63: #{tpu_custom_call.1} parent=1 // pred_check_branch
      %403 = sbr.rel (0) target = $region65
    $region64: #{tpu_custom_call.1} parent=1 // pred_region
      %405 = dma.done [#allocation5], 128
    $region65: #{tpu_custom_call.1} parent=1 // pred_fallthru
      _
    %406 = vsyncpa [#allocation4], 1
    %407 = vsyncpa [#allocation7], 1
    %408 = vsyncpa [#allocation10], 1
    %409 = vsyncpa [#allocation5], 1

</llo_original>
